<compile_context>
chip_gen: v6e
topology: v6e:2x2x1
jax: 0.10.0
libtpu: 0.0.40
codegen_flags: <defaults>
</compile_context>

<pallas_src>
import functools

import jax
import jax.numpy as jnp
from jax.experimental import pallas as pl
from jax.experimental.pallas import tpu as pltpu

BN_EPS = 1e-5
NEG_SLOPE = 0.2
LANE = 128


def _round_up(x, m):
    return ((x + m - 1) // m) * m


def _vmem_limit_bytes(cout, k, tm):
    """Scoped-VMEM cap sized from the double-buffered tiles (+ headroom)."""
    per_step = (2 * k * tm * 2        # xt tile   (bf16, double-buffered)
                + 2 * cout * tm * 2   # conv tile (bf16, double-buffered)
                + 2 * cout * tm * 4   # pass-2 f32 output tile (double-buffered)
                + 2 * cout * k * 2    # flattened weight
                + 16 * cout * 4)      # per-channel stat / scale / shift blocks
    # Raise the default scoped limit (v5e: 16 MiB, v6e/v7x: 32 MiB) but stay
    # within v7x's 64 MiB physical VMEM.
    return int(min(max(per_step + (8 << 20), 32 << 20), 64 << 20))


# ---------------------------------------------------------------------------
# Pass 1: one bf16 MXU contraction per column tile + per-tile BN partial sums.
# ---------------------------------------------------------------------------
def conv_stats_kernel(w_ref, xt_ref, conv_ref, psum_ref, psq_ref):
    """w_ref    : (Cout, K)   bf16  flattened conv weight (resident)
       xt_ref   : (K, TM)     bf16  im2col'd input columns for this tile
       conv_ref : (Cout, TM)  bf16  conv output tile (lane-dense)
       psum_ref : (1, Cout, 1) f32  per-tile per-channel sum
       psq_ref  : (1, Cout, 1) f32  per-tile per-channel sum of squares
    """
    conv = jnp.dot(w_ref[...], xt_ref[...],
                   preferred_element_type=jnp.float32)          # (Cout, TM) f32
    conv_ref[...] = conv.astype(conv_ref.dtype)
    psum_ref[...] = jnp.sum(conv, axis=1, keepdims=True)[None, ...]
    psq_ref[...] = jnp.sum(conv * conv, axis=1, keepdims=True)[None, ...]


# ---------------------------------------------------------------------------
# Pass 2: fused BN affine (precomputed scale/shift) + LeakyReLU(0.2).
# ---------------------------------------------------------------------------
def bn_lrelu_kernel(conv_ref, scale_ref, shift_ref, out_ref, *, neg_slope):
    y = conv_ref[...].astype(jnp.float32) * scale_ref[...] + shift_ref[...]
    out_ref[...] = jnp.maximum(y, neg_slope * y)                 # LeakyReLU


# ---------------------------------------------------------------------------
# Wrapper: NCHW in -> NCHW out (matches the PyTorch ConvBlock forward).
# ---------------------------------------------------------------------------
def conv_block_forward(x_nchw, w_oihw, bias, gamma, beta, *, tm=512):
    """`bias` is accepted for API parity with nn.Conv2d but is unused: under
    training-mode BatchNorm it is exactly cancelled by the mean subtraction."""
    del bias
    N, Cin, H, W = x_nchw.shape
    Cout = w_oihw.shape[0]
    K = 9 * Cin
    M = N * H * W

    # ---- wrapper glue (XLA): pad + im2col so each kernel step is 1 matmul.
    # Cast to bf16 FIRST so every wrapper op and the pass-1 HBM stream move
    # half the bytes.
    # TODO(synk): for large Cin*H*W, build the 9 taps in-kernel from a halo'd
    # (Cin, tm) strip (pltpu.roll / shifted pl.ds) to avoid the 9x HBM
    # expansion + relayout done here in XLA.
    x = x_nchw.astype(jnp.bfloat16)
    xp = jnp.pad(x, ((0, 0), (0, 0), (1, 1), (1, 1)))
    taps = [xp[:, :, dy:dy + H, dx:dx + W]
            for dy in range(3) for dx in range(3)]
    pat = jnp.stack(taps, axis=2)                       # (N, Cin, 9, H, W)
    xt = jnp.transpose(pat.reshape(N, K, H * W), (1, 0, 2)).reshape(K, M)

    # Column tiling: TM lanes per grid step (multiple of 128).
    tm = min(tm, _round_up(M, LANE))
    m_pad = _round_up(M, tm)
    if m_pad != M:
        # Zero columns contribute nothing to the partial sums (no conv bias
        # in-kernel) and are sliced off below, so padding is exact.
        xt = jnp.pad(xt, ((0, 0), (0, m_pad - M)))
    n_tiles = m_pad // tm

    w2 = w_oihw.reshape(Cout, K).astype(jnp.bfloat16)   # k = ci*9 + dy*3 + dx
    vmem_bytes = _vmem_limit_bytes(Cout, K, tm)

    # ---- pass 1: conv tiles + per-tile partial stats (fully parallel axis) --
    conv_flat, psum, psq = pl.pallas_call(
        conv_stats_kernel,
        grid=(n_tiles,),
        in_specs=[
            pl.BlockSpec((Cout, K), lambda i: (0, 0)),
            pl.BlockSpec((K, tm), lambda i: (0, i)),
        ],
        out_specs=(
            pl.BlockSpec((Cout, tm), lambda i: (0, i)),
            pl.BlockSpec((1, Cout, 1), lambda i: (i, 0, 0)),
            pl.BlockSpec((1, Cout, 1), lambda i: (i, 0, 0)),
        ),
        out_shape=(
            jax.ShapeDtypeStruct((Cout, m_pad), jnp.bfloat16),
            jax.ShapeDtypeStruct((n_tiles, Cout, 1), jnp.float32),
            jax.ShapeDtypeStruct((n_tiles, Cout, 1), jnp.float32),
        ),
        compiler_params=pltpu.CompilerParams(
            dimension_semantics=("parallel",),
            vmem_limit_bytes=vmem_bytes),
    )(w2, xt)

    # ---- tiny XLA reduce + hoisted BN affine (f32) --------------------------
    inv_m = 1.0 / float(M)
    ch_sum = jnp.sum(psum, axis=0)                      # (Cout, 1)
    ch_sq = jnp.sum(psq, axis=0)                        # (Cout, 1)
    mean = ch_sum * inv_m
    var = jnp.maximum(ch_sq * inv_m - mean * mean, 0.0)  # guard cancellation
    scale = gamma.reshape(Cout, 1).astype(jnp.float32) * jax.lax.rsqrt(var + BN_EPS)
    shift = beta.reshape(Cout, 1).astype(jnp.float32) - mean * scale

    # ---- pass 2: normalize + LeakyReLU (pure streaming FMA) -----------------
    out_flat = pl.pallas_call(
        functools.partial(bn_lrelu_kernel, neg_slope=NEG_SLOPE),
        grid=(n_tiles,),
        in_specs=[
            pl.BlockSpec((Cout, tm), lambda i: (0, i)),
            pl.BlockSpec((Cout, 1), lambda i: (0, 0)),
            pl.BlockSpec((Cout, 1), lambda i: (0, 0)),
        ],
        out_specs=pl.BlockSpec((Cout, tm), lambda i: (0, i)),
        out_shape=jax.ShapeDtypeStruct((Cout, m_pad), jnp.float32),
        compiler_params=pltpu.CompilerParams(
            dimension_semantics=("parallel",),
            vmem_limit_bytes=vmem_bytes),
    )(conv_flat, scale, shift)

    out = out_flat[:, :M].reshape(Cout, N, H, W)
    return jnp.transpose(out, (1, 0, 2, 3))


# ---------------------------------------------------------------------------
# Pure-JAX reference matching PyTorch ConvBlock forward (training-mode BN, f32).
# ---------------------------------------------------------------------------
def conv_block_reference(x_nchw, w_oihw, bias, gamma, beta):
    out = jax.lax.conv_general_dilated(
        x_nchw.astype(jnp.float32), w_oihw.astype(jnp.float32),
        window_strides=(1, 1), padding=((1, 1), (1, 1)),
        dimension_numbers=("NCHW", "OIHW", "NCHW"))
    out = out + bias[None, :, None, None]
    mean = out.mean(axis=(0, 2, 3), keepdims=True)
    var = ((out - mean) ** 2).mean(axis=(0, 2, 3), keepdims=True)
    y = (out - mean) * jax.lax.rsqrt(var + BN_EPS)
    y = y * gamma[None, :, None, None] + beta[None, :, None, None]
    return jnp.where(y >= 0, y, NEG_SLOPE * y)


if __name__ == "__main__":
    # Small shapes consistent with ConvBlock(in_channels=4, out_channels=8).
    N, Cin, Cout, H, W = 2, 4, 8, 16, 16

    key = jax.random.PRNGKey(0)
    kx, kw, kb, kg, kbeta = jax.random.split(key, 5)

    x = jax.random.normal(kx, (N, Cin, H, W), dtype=jnp.float32)
    w = jax.random.normal(kw, (Cout, Cin, 3, 3), dtype=jnp.float32) * 0.1  # OIHW
    b = jax.random.normal(kb, (Cout,), dtype=jnp.float32) * 0.1
    gamma = 1.0 + 0.1 * jax.random.normal(kg, (Cout,), dtype=jnp.float32)
    beta = 0.1 * jax.random.normal(kbeta, (Cout,), dtype=jnp.float32)

    out = conv_block_forward(x, w, b, gamma, beta)
    out = jax.block_until_ready(out)

    ref = conv_block_reference(x, w, b, gamma, beta)
    assert out.shape == (N, Cout, H, W), out.shape
    max_err = float(jnp.abs(out - ref).max())
    # Tolerance loosened vs. the pure-f32 variant because the MXU operands and
    # the conv intermediate are bf16 (stats/affine/output stay f32).
    assert jnp.allclose(out, ref, atol=5e-2, rtol=5e-2), max_err

    print("KERNEL_OK")
</pallas_src>

<mosaic_0001>
module attributes {stable_mosaic.version = 11 : i64} {
  func.func @conv_stats_kernel(%arg0: i32, %arg1: memref<8x36xbf16, #tpu.memory_space<vmem>>, %arg2: memref<36x512xbf16, #tpu.memory_space<vmem>>, %arg3: memref<8x512xbf16, #tpu.memory_space<vmem>>, %arg4: memref<1x8x1xf32, #tpu.memory_space<vmem>>, %arg5: memref<1x8x1xf32, #tpu.memory_space<vmem>>) attributes {dimension_semantics = [#tpu.dimension_semantics<parallel>], iteration_bounds = array<i64: 1>, scalar_prefetch = 0 : i64, scratch_operands = 0 : i64, tpu.core_type = #tpu.core_type<tc>, window_params = [{pipeline_mode = #tpu.pipeline_mode<synchronous>, transform_indices = @transform_0, window_bounds = array<i64: 8, 36>}, {transform_indices = @transform_1, window_bounds = array<i64: 36, 512>}, {transform_indices = @transform_2, window_bounds = array<i64: 8, 512>}, {transform_indices = @transform_3, window_bounds = array<i64: 1, 8, 1>}, {transform_indices = @transform_4, window_bounds = array<i64: 1, 8, 1>}]} {
    %c0 = arith.constant 0 : index
    %c0_0 = arith.constant 0 : index
    %0 = vector.load %arg1[%c0, %c0_0] : memref<8x36xbf16, #tpu.memory_space<vmem>>, vector<8x36xbf16>
    %c0_1 = arith.constant 0 : index
    %c0_2 = arith.constant 0 : index
    %1 = vector.load %arg2[%c0_1, %c0_2] : memref<36x512xbf16, #tpu.memory_space<vmem>>, vector<36x512xbf16>
    %cst = arith.constant dense<0.000000e+00> : vector<8x512xf32>
    %2 = tpu.matmul %0, %1, %cst {dimension_numbers = #tpu.dot_dimension_numbers<[1], [0], [0], [1], [0, 0, 1, 1], [], []>} : vector<8x36xbf16>, vector<36x512xbf16>, vector<8x512xf32> -> vector<8x512xf32>
    %3 = arith.truncf %2 : vector<8x512xf32> to vector<8x512xbf16>
    %c0_3 = arith.constant 0 : index
    %c0_4 = arith.constant 0 : index
    %4 = vector.load %arg3[%c0_3, %c0_4] : memref<8x512xbf16, #tpu.memory_space<vmem>>, vector<8x512xbf16>
    tpu.vector_store %arg3[%c0_3, %c0_4], %3 {strides = array<i32>} : memref<8x512xbf16, #tpu.memory_space<vmem>>, vector<8x512xbf16>,
    %cst_5 = arith.constant dense<0.000000e+00> : vector<8xf32>
    %5 = vector.multi_reduction <add>, %2, %cst_5 [1] : vector<8x512xf32> to vector<8xf32>
    %6 = vector.shape_cast %5 : vector<8xf32> to vector<8x1xf32>
    %7 = vector.shape_cast %6 : vector<8x1xf32> to vector<1x8x1xf32>
    %c0_6 = arith.constant 0 : index
    %c0_7 = arith.constant 0 : index
    %c0_8 = arith.constant 0 : index
    %8 = vector.load %arg4[%c0_6, %c0_7, %c0_8] : memref<1x8x1xf32, #tpu.memory_space<vmem>>, vector<1x8x1xf32>
    tpu.vector_store %arg4[%c0_6, %c0_7, %c0_8], %7 {strides = array<i32>} : memref<1x8x1xf32, #tpu.memory_space<vmem>>, vector<1x8x1xf32>,
    %9 = arith.mulf %2, %2 : vector<8x512xf32>
    %cst_9 = arith.constant dense<0.000000e+00> : vector<8xf32>
    %10 = vector.multi_reduction <add>, %9, %cst_9 [1] : vector<8x512xf32> to vector<8xf32>
    %11 = vector.shape_cast %10 : vector<8xf32> to vector<8x1xf32>
    %12 = vector.shape_cast %11 : vector<8x1xf32> to vector<1x8x1xf32>
    %c0_10 = arith.constant 0 : index
    %c0_11 = arith.constant 0 : index
    %c0_12 = arith.constant 0 : index
    %13 = vector.load %arg5[%c0_10, %c0_11, %c0_12] : memref<1x8x1xf32, #tpu.memory_space<vmem>>, vector<1x8x1xf32>
    tpu.vector_store %arg5[%c0_10, %c0_11, %c0_12], %12 {strides = array<i32>} : memref<1x8x1xf32, #tpu.memory_space<vmem>>, vector<1x8x1xf32>,
    return
  }
  func.func @transform_0(%arg0: i32) -> (i32, i32) {
    %c0_i32 = arith.constant 0 : i32
    %c0_i32_0 = arith.constant 0 : i32
    %c0_i32_1 = arith.constant 0 : i32
    return %c0_i32, %c0_i32_0 : i32, i32
  }
  func.func @transform_1(%arg0: i32) -> (i32, i32) {
    %c0_i32 = arith.constant 0 : i32
    %c0_i32_0 = arith.constant 0 : i32
    return %c0_i32, %arg0 : i32, i32
  }
  func.func @transform_2(%arg0: i32) -> (i32, i32) {
    %c0_i32 = arith.constant 0 : i32
    %c0_i32_0 = arith.constant 0 : i32
    return %c0_i32, %arg0 : i32, i32
  }
  func.func @transform_3(%arg0: i32) -> (i32, i32, i32) {
    %c0_i32 = arith.constant 0 : i32
    %c0_i32_0 = arith.constant 0 : i32
    %c0_i32_1 = arith.constant 0 : i32
    return %arg0, %c0_i32, %c0_i32_0 : i32, i32, i32
  }
  func.func @transform_4(%arg0: i32) -> (i32, i32, i32) {
    %c0_i32 = arith.constant 0 : i32
    %c0_i32_0 = arith.constant 0 : i32
    %c0_i32_1 = arith.constant 0 : i32
    return %arg0, %c0_i32, %c0_i32_0 : i32, i32, i32
  }
}

</mosaic_0001>

<llo_original>
// kernel: tpu_custom_call.1
$region0: #{tpu_custom_call.1}
  #allocation0 [shape = 'u32[]', space=smem, size = 0x4, offset = 0x4, fixed_abs, tag = 'smem constant byte address 0x4 - core index']
  #allocation1 [shape = 'u32[144,128]{1,0:T(1,128)}', space=vmem, size = 0x12000, scoped, tag = 'internal scratch']
  %s0 = inlined_call_operand.hbm [shape: bf16[8,36], index: 0, kind: input, shape index: {}]
  %s1 = inlined_call_operand.hbm [shape: bf16[36,512], index: 1, kind: input, shape index: {}]
  %s2 = inlined_call_operand.hbm [shape: bf16[8,512], index: 2, kind: output, shape index: {0}]
  %s3 = inlined_call_operand.vmem [shape: f32[1,8,1], index: 3, kind: output, shape index: {1}]
  %s4 = inlined_call_operand.vmem [shape: f32[1,8,1], index: 4, kind: output, shape index: {2}]
  %5 = xla_tuple %s2, %s3, %s4
  %s6 = sld [smem:[#allocation0]]
  $region42: #{tpu_custom_call.1} parent=0
    _
  %s8 = ssub.s32 1, %s6
  %s9 = scalar_select 0, %s8, %s6
  $region1: #{tpu_custom_call.1} parent=0
    #allocation2 [shape = 'u8[2048]{0}', space=vmem, size = 0x800, scoped, tag = 'input window, operand 0, single buffered']
    #allocation3 [shape = 's32[1]{0}', space=sflag, size = 0x4, scoped, tag = 'scoped memory for tpu_custom_call.1']
    #allocation4 [shape = 's32[1]{0}', space=sflag, size = 0x4, scoped, tag = 'scoped memory for tpu_custom_call.1']
    #allocation5 [shape = 'u8[40960]{0}', space=vmem, size = 0xa000, scoped, tag = 'input window, operand 1, single buffered']
    #allocation6 [shape = 's32[1]{0}', space=sflag, size = 0x4, scoped, tag = 'scoped memory for tpu_custom_call.1']
    #allocation7 [shape = 'u8[8192]{0}', space=vmem, size = 0x2000, scoped, tag = 'output window, operand 0, single buffered']
    %10 = vsyncpa [#allocation3], 0
    %11 = vsyncpa [#allocation6], 0
    %12 = vsyncpa [#allocation4], 0
    // Predicated region
    $region2: #{tpu_custom_call.1} parent=1 // pred_check
      _
    $region3: #{tpu_custom_call.1} parent=1 // pred_check_branch
      %14 = sbr.rel (0) target = $region5
    $region4: #{tpu_custom_call.1} parent=1 // pred_region
      %s16 = ssub.s32 64, 64
      %17 = vsyncadd [#allocation3], %s16
      %s19 = sshll.u32 [#allocation2], 4
      %s20 = int_to_ptr.vmem [resolvable:$true] %s19
      %22 = dma.hbm_to_vmem [thread:$0]  %s0, 64, %s20, [#allocation3]
    $region5: #{tpu_custom_call.1} parent=1 // pred_fallthru
      _
    // Predicated region
    $region6: #{tpu_custom_call.1} parent=1 // pred_check
      _
    $region7: #{tpu_custom_call.1} parent=1 // pred_check_branch
      %24 = sbr.rel (0) target = $region9
    $region8: #{tpu_custom_call.1} parent=1 // pred_region
      %s26 = ssub.s32 1280, 1280
      %27 = vsyncadd [#allocation6], %s26
      %s28 = sshll.u32 [#allocation5], 4
      %s29 = int_to_ptr.vmem [resolvable:$true] %s28
      %34 = dma.hbm_to_vmem [thread:$0]  %s1, 1280, %s29, [#allocation6], 256, 256, 16
    $region9: #{tpu_custom_call.1} parent=1 // pred_fallthru
      _
    // Predicated region
    $region10: #{tpu_custom_call.1} parent=1 // pred_check
      _
    $region11: #{tpu_custom_call.1} parent=1 // pred_check_branch
      %36 = sbr.rel (0) target = $region13
    $region12: #{tpu_custom_call.1} parent=1 // pred_region
      %37 = dma.done [#allocation3], 64
    $region13: #{tpu_custom_call.1} parent=1 // pred_fallthru
      _
    // Predicated region
    $region14: #{tpu_custom_call.1} parent=1 // pred_check
      _
    $region15: #{tpu_custom_call.1} parent=1 // pred_check_branch
      %39 = sbr.rel (0) target = $region17
    $region16: #{tpu_custom_call.1} parent=1 // pred_region
      %40 = dma.done [#allocation6], 1280
    $region17: #{tpu_custom_call.1} parent=1 // pred_fallthru
      _
    %v42 = vld [vmem:[#allocation2] sm:$0xf]
    %v43 = vld [vmem:[#allocation5] sm:$0xff]
    %v44 = vld [vmem:[#allocation5 + $0x8] sm:$0xff]
    %v45 = vld [vmem:[#allocation5 + $0x10] sm:$0xff]
    %v46 = vld [vmem:[#allocation5 + $0x18] sm:$0xff]
    %v47 = vld [vmem:[#allocation5 + $0x20] sm:$0xff]
    %v48 = vld [vmem:[#allocation5 + $0x28] sm:$0xff]
    %v49 = vld [vmem:[#allocation5 + $0x30] sm:$0xff]
    %v50 = vld [vmem:[#allocation5 + $0x38] sm:$0xff]
    %v51 = vld [vmem:[#allocation5 + $0x40] sm:$0x33]
    %v52 = vld [vmem:[#allocation5 + $0x48] sm:$0x33]
    %v63 = vunpack.c.l.b16 %v43
    %v64 = vunpack.c.h.b16 %v43
    %v65 = vunpack.c.l.b16 %v44
    %v66 = vunpack.c.h.b16 %v44
    %v67 = vunpack.c.l.b16 %v45
    %v68 = vunpack.c.h.b16 %v45
    %v69 = vunpack.c.l.b16 %v46
    %v70 = vunpack.c.h.b16 %v46
    %v71 = vunpack.c.l.b16 %v47
    %v72 = vunpack.c.h.b16 %v47
    %v73 = vunpack.c.l.b16 %v48
    %v74 = vunpack.c.h.b16 %v48
    %v75 = vunpack.c.l.b16 %v49
    %v76 = vunpack.c.h.b16 %v49
    %v77 = vunpack.c.l.b16 %v50
    %v78 = vunpack.c.h.b16 %v50
    %v79 = vunpack.c.l.b16 %v51
    %v80 = vunpack.c.h.b16 %v51
    %v81 = vunpack.c.l.b16 %v52
    %v82 = vunpack.c.h.b16 %v52
    %v83 = vpack.c.b16 %v67, %v63
    %v84 = vpack.c.b16 %v68, %v64
    %v85 = vpack.c.b16 %v69, %v65
    %v86 = vpack.c.b16 %v70, %v66
    %v87 = vpack.c.b16 %v75, %v71
    %v88 = vpack.c.b16 %v76, %v72
    %v89 = vpack.c.b16 %v77, %v73
    %v90 = vpack.c.b16 %v78, %v74
    %v91 = vpack.c.b16 %v79, %v79
    %v92 = vpack.c.b16 %v80, %v80
    %v93 = vpack.c.b16 %v81, %v81
    %v94 = vpack.c.b16 %v82, %v82
    %vm103 = vcmask 293888
    %v105 = vsel %vm103, %v42, 0
    %vm107 = vcmask 1041408
    %v109 = vsel %vm107, %v91, 0
    %v112 = vsel %vm107, %v92, 0
    %v115 = vsel %vm107, %v93, 0
    %v118 = vsel %vm107, %v94, 0
    %120 = vmatprep.subr.bf16.mxu0 0
    %121 = vmatpush1.bf16.msra.mxu0 0
    %122 = vmatprep.subr.bf16.mxu0 0
    %123 = vmatpush1.bf16.msra.mxu0 0
    %124 = vmatprep.subr.bf16.mxu0 0
    %125 = vmatpush1.bf16.msra.mxu0 0
    %126 = vmatprep.subr.bf16.mxu0 0
    %127 = vmatpush1.bf16.msra.mxu0 0
    %128 = vmatprep.subr.bf16.mxu0 0
    %129 = vmatpush1.bf16.msra.mxu0 0
    %130 = vmatprep.subr.bf16.mxu0 %v112
    %131 = vmatpush1.bf16.msra.mxu0 %v109
    %132 = vmatprep.subr.bf16.mxu0 %v88
    %133 = vmatpush1.bf16.msra.mxu0 %v87
    %134 = vmatprep.subr.bf16.mxu0 %v84
    %135 = vmatpush1.bf16.msra.mxu0 %v83
    %136 = vmatprep.subr.bf16.mxu0 0
    %137 = vmatpush2.bf16.msra.mxu0 0
    %138 = vmatprep.subr.bf16.mxu0 0
    %139 = vmatpush2.bf16.msra.mxu0 0
    %140 = vmatprep.subr.bf16.mxu0 0
    %141 = vmatpush2.bf16.msra.mxu0 0
    %142 = vmatprep.subr.bf16.mxu0 0
    %143 = vmatpush2.bf16.msra.mxu0 0
    %144 = vmatprep.subr.bf16.mxu0 0
    %145 = vmatpush2.bf16.msra.mxu0 0
    %146 = vmatprep.subr.bf16.mxu0 0
    %147 = vmatpush2.bf16.msra.mxu0 0
    %148 = vmatprep.subr.bf16.mxu0 0
    %149 = vmatpush2.bf16.msra.mxu0 0
    %150 = vmatprep.subr.bf16.mxu0 0
    %151 = vmatpush2.bf16.msra.mxu0 0
    %152 = vmatprep.mubr.bf16.mxu0 0
    %153 = vmatmul.mubr.bf16.gmra.mxu0 %v105
    %v154 = vpop.f32.mrf.mxu0
    %v155 = vadd.f32 0.0, %v154
    %v156 = vpop.f32.mrf.mxu0
    %v157 = vadd.f32 0.0, %v156
    %v158 = vpop.f32.mrf.mxu0
    %v159 = vpop.f32.mrf.mxu0
    %160 = vdwg.mxu0
    %161 = vmatprep.subr.bf16.mxu0 0
    %162 = vmatpush1.bf16.msra.mxu0 0
    %163 = vmatprep.subr.bf16.mxu0 0
    %164 = vmatpush1.bf16.msra.mxu0 0
    %165 = vmatprep.subr.bf16.mxu0 0
    %166 = vmatpush1.bf16.msra.mxu0 0
    %167 = vmatprep.subr.bf16.mxu0 0
    %168 = vmatpush1.bf16.msra.mxu0 0
    %169 = vmatprep.subr.bf16.mxu0 0
    %170 = vmatpush1.bf16.msra.mxu0 0
    %171 = vmatprep.subr.bf16.mxu0 %v118
    %172 = vmatpush1.bf16.msra.mxu0 %v115
    %173 = vmatprep.subr.bf16.mxu0 %v90
    %174 = vmatpush1.bf16.msra.mxu0 %v89
    %175 = vmatprep.subr.bf16.mxu0 %v86
    %176 = vmatpush1.bf16.msra.mxu0 %v85
    %177 = vmatprep.subr.bf16.mxu0 0
    %178 = vmatpush2.bf16.msra.mxu0 0
    %179 = vmatprep.subr.bf16.mxu0 0
    %180 = vmatpush2.bf16.msra.mxu0 0
    %181 = vmatprep.subr.bf16.mxu0 0
    %182 = vmatpush2.bf16.msra.mxu0 0
    %183 = vmatprep.subr.bf16.mxu0 0
    %184 = vmatpush2.bf16.msra.mxu0 0
    %185 = vmatprep.subr.bf16.mxu0 0
    %186 = vmatpush2.bf16.msra.mxu0 0
    %187 = vmatprep.subr.bf16.mxu0 0
    %188 = vmatpush2.bf16.msra.mxu0 0
    %189 = vmatprep.subr.bf16.mxu0 0
    %190 = vmatpush2.bf16.msra.mxu0 0
    %191 = vmatprep.subr.bf16.mxu0 0
    %192 = vmatpush2.bf16.msra.mxu0 0
    %193 = vmatprep.mubr.bf16.mxu0 0
    %194 = vmatmul.mubr.bf16.gmra.mxu0 %v105
    %v195 = vpop.f32.mrf.mxu0
    %v196 = vadd.f32 0.0, %v195
    %v197 = vpop.f32.mrf.mxu0
    %v198 = vadd.f32 0.0, %v197
    %v199 = vpop.f32.mrf.mxu0
    %v200 = vpop.f32.mrf.mxu0
    %201 = vdwg.mxu0
    %v202 = vpack.c.bf16 %v155, %v155
    %v203 = vpack.c.bf16 %v157, %v157
    %v204 = vpack.c.bf16 %v196, %v196
    %v205 = vpack.c.bf16 %v198, %v198
    %v210 = vunpack.c.l.b16 %v202
    %v211 = vunpack.c.l.b16 %v203
    %v212 = vunpack.c.l.b16 %v204
    %v213 = vunpack.c.l.b16 %v205
    %v214 = vpack.c.b16 %v211, %v210
    %v215 = vpack.c.b16 %v213, %v212
    %218 = vst [vmem:[#allocation7] sm:$0xff] %v214
    %219 = vst [vmem:[#allocation7 + $0x8] sm:$0xff] %v215
    %v220 = vadd.f32 %v155, %v157
    %v221 = vadd.f32 %v220, %v196
    %v222 = vadd.f32 %v221, %v198
    %223 = vadd.xlane.f32.xlu0 %v222
    %v224 = vpop.xlane.xlu0 %223
    %vm225 = vcmask 7168
    %226 = vst.msk [vmem:[%s3] sm:$0xff] %vm225, %v224
    %v227 = vmul.f32 %v155, %v155
    %v228 = vmul.f32 %v157, %v157
    %v229 = vmul.f32 %v196, %v196
    %v230 = vmul.f32 %v198, %v198
    %v231 = vadd.f32 %v227, %v228
    %v232 = vadd.f32 %v231, %v229
    %v233 = vadd.f32 %v232, %v230
    %234 = vadd.xlane.f32.xlu0 %v233
    %v235 = vpop.xlane.xlu0 %234
    %236 = vst.msk [vmem:[%s4] sm:$0xff] %vm225, %v235
    // Predicated region
    $region18: #{tpu_custom_call.1} parent=1 // pred_check
      _
    $region19: #{tpu_custom_call.1} parent=1 // pred_check_branch
      %238 = sbr.rel (0) target = $region21
    $region20: #{tpu_custom_call.1} parent=1 // pred_region
      %s240 = ssub.s32 256, 256
      %241 = vsyncadd [#allocation4], %s240
      %s243 = sshll.u32 [#allocation7], 4
      %s244 = int_to_ptr.vmem [resolvable:$true] %s243
      %246 = dma.vmem_to_hbm [thread:$0]  %s244, 256, %s2, [#allocation4]
    $region21: #{tpu_custom_call.1} parent=1 // pred_fallthru
      _
    // Predicated region
    $region22: #{tpu_custom_call.1} parent=1 // pred_check
      _
    $region23: #{tpu_custom_call.1} parent=1 // pred_check_branch
      %248 = sbr.rel (0) target = $region25
    $region24: #{tpu_custom_call.1} parent=1 // pred_region
      _
    $region25: #{tpu_custom_call.1} parent=1 // pred_fallthru
      _
    // Predicated region
    $region26: #{tpu_custom_call.1} parent=1 // pred_check
      _
    $region27: #{tpu_custom_call.1} parent=1 // pred_check_branch
      %250 = sbr.rel (0) target = $region29
    $region28: #{tpu_custom_call.1} parent=1 // pred_region
      _
    $region29: #{tpu_custom_call.1} parent=1 // pred_fallthru
      _
    // Predicated region
    $region30: #{tpu_custom_call.1} parent=1 // pred_check
      _
    $region31: #{tpu_custom_call.1} parent=1 // pred_check_branch
      %252 = sbr.rel (0) target = $region33
    $region32: #{tpu_custom_call.1} parent=1 // pred_region
      %253 = dma.done [#allocation4], 256
    $region33: #{tpu_custom_call.1} parent=1 // pred_fallthru
      _
    // Predicated region
    $region34: #{tpu_custom_call.1} parent=1 // pred_check
      _
    $region35: #{tpu_custom_call.1} parent=1 // pred_check_branch
      %255 = sbr.rel (0) target = $region37
    $region36: #{tpu_custom_call.1} parent=1 // pred_region
      _
    $region37: #{tpu_custom_call.1} parent=1 // pred_fallthru
      _
    // Predicated region
    $region38: #{tpu_custom_call.1} parent=1 // pred_check
      _
    $region39: #{tpu_custom_call.1} parent=1 // pred_check_branch
      %257 = sbr.rel (0) target = $region41
    $region40: #{tpu_custom_call.1} parent=1 // pred_region
      _
    $region41: #{tpu_custom_call.1} parent=1 // pred_fallthru
      _
    %258 = vsyncpa [#allocation3], 1
    %259 = vsyncpa [#allocation6], 1
    %260 = vsyncpa [#allocation4], 1

</llo_original>
